<compile_context>
chip_gen: v7x
topology: tpu7x:2x2x1
jax: 0.10.0
libtpu: 0.0.40
codegen_flags: <defaults>
</compile_context>

<pallas_src>
import functools

import jax
import jax.numpy as jnp
from jax.experimental import pallas as pl
from jax.experimental.pallas import tpu as pltpu


def _round_up(x, m):
    return (x + m - 1) // m * m


def _rmsnorm_kernel(x_ref, gamma_ref, o_ref, *, eps):
    x = x_ref[...]                                     # (rows, D) slab, native dtype
    xf = x.astype(jnp.float32)
    ms = jnp.mean(xf * xf, axis=-1, keepdims=True)     # (rows, 1) f32 reduction
    # Exact per-row scale: gamma / (rms + eps) — tiny vector, cost hidden.
    scale = gamma_ref[0] / (jnp.sqrt(ms) + eps)        # (rows, 1) f32
    o_ref[...] = (x * scale.astype(x.dtype)).astype(o_ref.dtype)


def _choose_block_rows(R, D, itemsize, target_bytes=2 << 20):
    """Rows per grid step: ~target_bytes per (rows, D) slab, multiple of 8."""
    row_bytes = max(D * itemsize, 1)
    tr = max(8, (target_bytes // row_bytes) // 8 * 8)
    tr = min(tr, _round_up(R, 8))
    # Keep >= 2 grid steps when there is enough work, so the "parallel" axis can
    # shard across both v7x TensorCores (harmless on single-TC v5e/v6e).
    if pl.cdiv(R, tr) < 2 and R > 8:
        tr = max(8, _round_up(pl.cdiv(R, 2), 8))
    return tr


def rmsnorm_pallas(x, gamma, *, eps=1e-5):
    """RMSNorm over the last axis of `x`; `gamma` is a scalar parameter (shape (1,))."""
    orig_shape = x.shape
    D = orig_shape[-1]
    x2 = x.reshape(-1, D)                              # flatten leading dims -> rows
    R = x2.shape[0]

    tr = _choose_block_rows(R, D, x2.dtype.itemsize)
    grid = (pl.cdiv(R, tr),)                           # no pad/slice round trip

    gamma_arr = jnp.asarray(gamma, jnp.float32).reshape((1,))

    out = pl.pallas_call(
        functools.partial(_rmsnorm_kernel, eps=eps),
        out_shape=jax.ShapeDtypeStruct((R, D), x.dtype),
        grid=grid,
        in_specs=[
            pl.BlockSpec((tr, D), lambda i: (i, 0)),                  # x rows slab
            pl.BlockSpec(memory_space=pltpu.MemorySpace.SMEM),        # scalar gamma
        ],
        out_specs=pl.BlockSpec((tr, D), lambda i: (i, 0)),
        compiler_params=pltpu.CompilerParams(
            dimension_semantics=("parallel",)),
    )(x2, gamma_arr)

    return out.reshape(orig_shape)


def rmsnorm_ref(x, gamma, *, eps=1e-5):
    """Pure-JAX reference mirroring the PyTorch module exactly."""
    norms = jnp.sqrt(jnp.mean(x.astype(jnp.float32) ** 2, axis=-1, keepdims=True))
    return (x * jnp.asarray(gamma, jnp.float32).reshape(()) / (norms + eps)).astype(x.dtype)


if __name__ == "__main__":
    key = jax.random.PRNGKey(0)
    # batch=2, seq=8, hidden=256 (lane-dense last dim; kernel handles any D).
    B, L, D = 2, 8, 256
    x = jax.random.normal(key, (B, L, D), dtype=jnp.float32)
    gamma = jnp.ones((1,), jnp.float32)   # matches nn.Parameter(torch.ones(1))

    out = jax.block_until_ready(rmsnorm_pallas(x, gamma))
    ref = jax.block_until_ready(rmsnorm_ref(x, gamma))

    assert out.shape == x.shape
    max_err = float(jnp.max(jnp.abs(out - ref)))
    # Exact divide in-kernel: only association-order rounding differences remain.
    assert max_err < 1e-5, f"mismatch vs reference: {max_err}"
    print("KERNEL_OK")
</pallas_src>

<mosaic_0001>
module attributes {stable_mosaic.version = 11 : i64} {
  func.func @_rmsnorm_kernel(%arg0: i32, %arg1: memref<8x256xf32, #tpu.memory_space<vmem>>, %arg2: memref<1xf32, #tpu.memory_space<smem>>, %arg3: memref<8x256xf32, #tpu.memory_space<vmem>>) attributes {dimension_semantics = [#tpu.dimension_semantics<parallel>], iteration_bounds = array<i64: 2>, scalar_prefetch = 0 : i64, scratch_operands = 0 : i64, tpu.core_type = #tpu.core_type<tc>, window_params = [{transform_indices = @transform_0, window_bounds = array<i64: 8, 256>}, {transform_indices = @transform_1, window_bounds = array<i64: 1>}, {transform_indices = @transform_2, window_bounds = array<i64: 8, 256>}]} {
    %c0 = arith.constant 0 : index
    %c0_0 = arith.constant 0 : index
    %0 = vector.load %arg1[%c0, %c0_0] : memref<8x256xf32, #tpu.memory_space<vmem>>, vector<8x256xf32>
    %1 = arith.mulf %0, %0 : vector<8x256xf32>
    %cst = arith.constant dense<0.000000e+00> : vector<8xf32>
    %2 = vector.multi_reduction <add>, %1, %cst [1] : vector<8x256xf32> to vector<8xf32>
    %3 = vector.shape_cast %2 : vector<8xf32> to vector<8x1xf32>
    %cst_1 = arith.constant 2.560000e+02 : f32
    %4 = vector.broadcast %cst_1 : f32 to vector<8x1xf32>
    %5 = arith.divf %3, %4 : vector<8x1xf32>
    %c0_2 = arith.constant 0 : index
    %6 = memref.load %arg2[%c0_2] : memref<1xf32, #tpu.memory_space<smem>>
    %7 = math.sqrt %5 : vector<8x1xf32>
    %cst_3 = arith.constant 9.99999974E-6 : f32
    %8 = vector.broadcast %cst_3 : f32 to vector<8x1xf32>
    %9 = arith.addf %7, %8 : vector<8x1xf32>
    %10 = vector.broadcast %6 : f32 to vector<8x1xf32>
    %11 = arith.divf %10, %9 : vector<8x1xf32>
    %12 = vector.broadcast %11 : vector<8x1xf32> to vector<8x256xf32>
    %13 = arith.mulf %0, %12 : vector<8x256xf32>
    %c0_4 = arith.constant 0 : index
    %c0_5 = arith.constant 0 : index
    %14 = vector.load %arg3[%c0_4, %c0_5] : memref<8x256xf32, #tpu.memory_space<vmem>>, vector<8x256xf32>
    tpu.vector_store %arg3[%c0_4, %c0_5], %13 {strides = array<i32>} : memref<8x256xf32, #tpu.memory_space<vmem>>, vector<8x256xf32>,
    return
  }
  func.func @transform_0(%arg0: i32) -> (i32, i32) {
    %c0_i32 = arith.constant 0 : i32
    %c0_i32_0 = arith.constant 0 : i32
    return %arg0, %c0_i32 : i32, i32
  }
  func.func @transform_1(%arg0: i32) -> i32 {
    %c0_i32 = arith.constant 0 : i32
    %c0_i32_0 = arith.constant 0 : i32
    return %c0_i32 : i32
  }
  func.func @transform_2(%arg0: i32) -> (i32, i32) {
    %c0_i32 = arith.constant 0 : i32
    %c0_i32_0 = arith.constant 0 : i32
    return %arg0, %c0_i32 : i32, i32
  }
}

</mosaic_0001>

<llo_original>
// kernel: tpu_custom_call.1
$region0: #{tpu_custom_call.1}
  #allocation0 [shape = 'u32[]', space=smem, size = 0x4, offset = 0x4, fixed_abs, tag = 'smem constant byte address 0x4 - core index']
  #allocation1 [shape = 'u32[144,128]{1,0:T(1,128)}', space=vmem, size = 0x12000, scoped, tag = 'internal scratch']
  #allocation2 [shape = 'f32[1]{0:T(128)S(6)}', space=smem, size = 0x200, scoped, tag = 'scoped memory for tpu_custom_call.1']
  %s0 = inlined_call_operand.hbm [shape: f32[16,256], index: 0, kind: input, shape index: {}]
  %s1 = inlined_call_operand.<no memory space> [shape: f32[1], index: 1, kind: input, shape index: {}]
  %s2 = inlined_call_operand.hbm [shape: f32[16,256], index: 2, kind: output, shape index: {}]
  %s3 = sld [smem:[#allocation0]]
  $region45: #{tpu_custom_call.1} parent=0
    _
  %s5 = ssub.s32 1, %s3
  %s6 = scalar_select 0, %s5, %s3
  %7 = sst [smem:[#allocation2]] %s1
  $region1: #{tpu_custom_call.1} parent=0
    #allocation3 [shape = 'u8[16384]{0}', space=vmem, size = 0x4000, scoped, tag = 'input window, operand 0']
    #allocation4 [shape = 's32[2]{0}', space=sflag, size = 0x8, scoped, tag = 'scoped memory for tpu_custom_call.1']
    #allocation5 [shape = 's32[2]{0}', space=sflag, size = 0x8, scoped, tag = 'scoped memory for tpu_custom_call.1']
    #allocation6 [shape = 'u8[16384]{0}', space=vmem, size = 0x4000, scoped, tag = 'output window, operand 0']
    %8 = vsyncpa [#allocation4], 0
    %s9 = scalar_lea.sflag [#allocation4], 1
    %10 = vsyncpa %s9, 0
    %11 = vsyncpa [#allocation5], 0
    %s12 = scalar_lea.sflag [#allocation5], 1
    %13 = vsyncpa %s12, 0
    loop: start=0, step=1, limit=4
    $region2: #{tpu_custom_call.1} parent=1 // loop_pre_header
      _
    $region3: #{tpu_custom_call.1} parent=1 // loop_header
      %s15 = sphi 0, %s19
      %p16 = scmp.ge.s32.totalorder %s15, 4
      %s25 = sphi 0, %s27
      %s28 = sphi 0, %s25
      %s29 = sphi 0, %s28
      %s45 = sphi 0, %s29
      %s49 = sphi 0, %s49
      %s51 = sphi 0, %s49
      %s52 = sphi 0, %s51
      %s66 = sphi 0, %s52
      %s72 = sphi 0, %s74
      %s75 = sphi 0, %s72
      %s76 = sphi 0, %s75
      %s92 = sphi 0, %s76
    $region4: #{tpu_custom_call.1} parent=1 // loop_header_branch
      %18 = sbr.rel (%p16) target = $region8
    $region5: #{tpu_custom_call.1} parent=1 // loop_body
      %s20 = ssub.s32 %s15, 1
      %s21 = ssub.s32 %s15, 2
      %s22 = sadd.s32 %s15, 1
      %s23 = ssub.s32 %s15, %s22
      %p24 = scmp.eq.s32.totalorder %s23, 0
      %s26 = sadd.s32 %s25, 1
      %s27 = scalar_select %p24, %s25, %s26
      %p30 = pneg %p24
      %p31 = scmp.eq.s32.totalorder %s15, 1
      %p32 = por %p30, %p31
      %p33 = scmp.ne.s32.totalorder %s25, %s28
      %p34 = scmp.eq.s32.totalorder %s15, 0
      %p35 = por %p33, %p34
      %p36 = scmp.ne.s32.totalorder %s25, %s28
      %p37 = scmp.eq.s32.totalorder %s20, 1
      %p38 = por %p36, %p37
      %p39 = scmp.ne.s32.totalorder %s28, %s29
      %p40 = scmp.eq.s32.totalorder %s20, 0
      %p41 = por %p39, %p40
      %p42 = scmp.ne.s32.totalorder %s28, %s29
      %p43 = scmp.eq.s32.totalorder %s21, 1
      %p44 = por %p42, %p43
      %p46 = scmp.ne.s32.totalorder %s29, %s45
      %p47 = scmp.eq.s32.totalorder %s21, 0
      %p48 = por %p46, %p47
      %s50 = sadd.s32 %s49, 1
      %p53 = scmp.eq.s32.totalorder %s15, 1
      %p54 = scmp.ne.s32.totalorder %s49, %s51
      %p55 = scmp.eq.s32.totalorder %s15, 0
      %p56 = por %p54, %p55
      %p57 = scmp.ne.s32.totalorder %s49, %s51
      %p58 = scmp.eq.s32.totalorder %s20, 1
      %p59 = por %p57, %p58
      %p60 = scmp.ne.s32.totalorder %s51, %s52
      %p61 = scmp.eq.s32.totalorder %s20, 0
      %p62 = por %p60, %p61
      %p63 = scmp.ne.s32.totalorder %s51, %s52
      %p64 = scmp.eq.s32.totalorder %s21, 1
      %p65 = por %p63, %p64
      %p67 = scmp.ne.s32.totalorder %s52, %s66
      %p68 = scmp.eq.s32.totalorder %s21, 0
      %p69 = por %p67, %p68
      %s70 = ssub.s32 %s15, %s22
      %p71 = scmp.eq.s32.totalorder %s70, 0
      %s73 = sadd.s32 %s72, 1
      %s74 = scalar_select %p71, %s72, %s73
      %p77 = pneg %p71
      %p78 = scmp.eq.s32.totalorder %s15, 1
      %p79 = por %p77, %p78
      %p80 = scmp.ne.s32.totalorder %s72, %s75
      %p81 = scmp.eq.s32.totalorder %s15, 0
      %p82 = por %p80, %p81
      %p83 = scmp.ne.s32.totalorder %s72, %s75
      %p84 = scmp.eq.s32.totalorder %s20, 1
      %p85 = por %p83, %p84
      %p86 = scmp.ne.s32.totalorder %s75, %s76
      %p87 = scmp.eq.s32.totalorder %s20, 0
      %p88 = por %p86, %p87
      %p89 = scmp.ne.s32.totalorder %s75, %s76
      %p90 = scmp.eq.s32.totalorder %s21, 1
      %p91 = por %p89, %p90
      %p93 = scmp.ne.s32.totalorder %s76, %s92
      %p94 = scmp.eq.s32.totalorder %s21, 0
      %p95 = por %p93, %p94
      %p96 = scmp.le.s32.totalorder 1, %s15
      %p97 = scmp.lt.s32.totalorder %s15, 3
      %p98 = pnand %p96, %p97
      %p99 = pneg %p98
      // Predicated region
      $region9: #{tpu_custom_call.1} parent=5 // pred_check
        _
      $region10: #{tpu_custom_call.1} parent=5 // pred_check_branch
        %101 = sbr.rel (%p98) target = $region12
      $region11: #{tpu_custom_call.1} parent=5 // pred_region
        %s102 = ssub.s32 %s15, 1
        // Predicated region
        $region13: #{tpu_custom_call.1} parent=11 // pred_check
          %p103 = pneg %p62
        $region14: #{tpu_custom_call.1} parent=11 // pred_check_branch
          %105 = sbr.rel (%p103) target = $region16
        $region15: #{tpu_custom_call.1} parent=11 // pred_region
          _
        $region16: #{tpu_custom_call.1} parent=11 // pred_fallthru
          _
      $region12: #{tpu_custom_call.1} parent=5 // pred_fallthru
        _
      %p106 = scmp.lt.s32.totalorder %s15, 2
      // Predicated region
      $region17: #{tpu_custom_call.1} parent=5 // pred_check
        %p107 = pneg %p106
      $region18: #{tpu_custom_call.1} parent=5 // pred_check_branch
        %109 = sbr.rel (%p107) target = $region20
      $region19: #{tpu_custom_call.1} parent=5 // pred_region
        // Predicated region
        $region21: #{tpu_custom_call.1} parent=19 // pred_check
          %p110 = pneg %p35
        $region22: #{tpu_custom_call.1} parent=19 // pred_check_branch
          %112 = sbr.rel (%p110) target = $region24
        $region23: #{tpu_custom_call.1} parent=19 // pred_region
          %s113 = sand.u32 %s25, 1
          %s114 = scalar_lea.sflag [#allocation4], %s113
          %s115 = sand.u32 %s25, 1
          %s116 = smul.addr %s115, 16
          %s117 = scalar_lea.vmem [#allocation3], %s116
          %s119 = ssub.s32 256, 256
          %120 = vsyncadd %s114, %s119
          %s121 = smul.addr %s15, 2
          %s122 = smul.addr %s121, 128
          %s123 = scalar_lea.hbm %s0, %s122
          %s125 = sshll.u32 %s117, 4
          %s126 = int_to_ptr.vmem [resolvable:$true] %s125
          %128 = dma.hbm_to_vmem [thread:$0]  %s123, 256, %s126, %s114
        $region24: #{tpu_custom_call.1} parent=19 // pred_fallthru
          _
      $region20: #{tpu_custom_call.1} parent=5 // pred_fallthru
        _
      %p129 = scmp.le.s32.totalorder 1, %s15
      %p130 = scmp.lt.s32.totalorder %s15, 3
      %p131 = pnand %p129, %p130
      %p132 = pneg %p131
      // Predicated region
      $region25: #{tpu_custom_call.1} parent=5 // pred_check
        _
      $region26: #{tpu_custom_call.1} parent=5 // pred_check_branch
        %134 = sbr.rel (%p131) target = $region28
      $region27: #{tpu_custom_call.1} parent=5 // pred_region
        %s135 = ssub.s32 %s15, 1
        %s136 = sand.u32 %s28, 1
        %s137 = scalar_lea.sflag [#allocation4], %s136
        %s138 = sand.u32 %s28, 1
        %s139 = smul.addr %s138, 16
        %s140 = scalar_lea.vmem [#allocation3], %s139
        // Predicated region
        $region29: #{tpu_custom_call.1} parent=27 // pred_check
          %p141 = pneg %p41
        $region30: #{tpu_custom_call.1} parent=27 // pred_check_branch
          %143 = sbr.rel (%p141) target = $region32
        $region31: #{tpu_custom_call.1} parent=27 // pred_region
          %144 = dma.done %s137, 256
        $region32: #{tpu_custom_call.1} parent=27 // pred_fallthru
          _
        %s145 = sand.u32 %s28, 1
        %s146 = scalar_lea.sflag [#allocation4], %s145
        %s147 = sand.u32 %s28, 1
        %s148 = smul.addr %s147, 16
        %s149 = scalar_lea.vmem [#allocation3], %s148
        %p150 = pneg %p41
        %p151 = pneg %p38
        %p152 = pneg %p62
        %p153 = pneg %p59
        %p154 = pneg %p88
        %p155 = pneg %p85
        %s156 = sand.u32 %s75, 1
        %s157 = scalar_lea.sflag [#allocation5], %s156
        %s158 = sand.u32 %s75, 1
        %s159 = smul.addr %s158, 16
        %s160 = scalar_lea.vmem [#allocation6], %s159
        %v161 = vld [vmem:[%s140] sm:$0xff]
        %v162 = vld [vmem:[%s140 + $0x8] sm:$0xff]
        %v163 = vmul.f32 %v161, %v161
        %v164 = vmul.f32 %v162, %v162
        %v165 = vadd.f32 %v163, %v164
        %166 = vadd.xlane.f32.xlu0 %v165
        %v167 = vpop.xlane.xlu0 %166
        %v168 = vrcp.pop 256.0
        %v169 = vmul.f32 %v167, %v168
        %s170 = sld [smem:[#allocation2]]
        %v171 = vrsqrt.pop %v169
        %v172 = vmul.f32 %v169, %v171
        %vm173 = vcmp.eq.f32.partialorder %v169, inf
        %v174 = vsel %vm173, %v169, %v172
        %vm175 = vcmp.eq.f32.partialorder %v169, 0.0
        %v176 = vand.u32 %v169, 2147483648
        %v177 = vsel %vm175, %v176, %v174
        %v178 = vadd.f32 %v177, 1e-05
        %v179 = vstv %s170
        %v180 = vrcp.pop %v178
        %v181 = vmul.f32 %v179, %v180
        %v182 = vmul.f32 %v161, %v181
        %v183 = vmul.f32 %v162, %v181
        %184 = vst [vmem:[%s160] sm:$0xff] %v182
        %185 = vst [vmem:[%s160 + $0x8] sm:$0xff] %v183
        %s186 = sand.u32 %s75, 1
        %s187 = scalar_lea.sflag [#allocation5], %s186
        %s188 = sand.u32 %s75, 1
        %s189 = smul.addr %s188, 16
        %s190 = scalar_lea.vmem [#allocation6], %s189
        // Predicated region
        $region33: #{tpu_custom_call.1} parent=27 // pred_check
          %p191 = pneg %p85
        $region34: #{tpu_custom_call.1} parent=27 // pred_check_branch
          %193 = sbr.rel (%p191) target = $region36
        $region35: #{tpu_custom_call.1} parent=27 // pred_region
          %s195 = ssub.s32 256, 256
          %196 = vsyncadd %s187, %s195
          %s197 = smul.addr %s20, 2
          %s198 = smul.addr %s197, 128
          %s199 = scalar_lea.hbm %s2, %s198
          %s201 = sshll.u32 %s190, 4
          %s202 = int_to_ptr.vmem [resolvable:$true] %s201
          %204 = dma.vmem_to_hbm [thread:$0]  %s202, 256, %s199, %s187
        $region36: #{tpu_custom_call.1} parent=27 // pred_fallthru
          _
      $region28: #{tpu_custom_call.1} parent=5 // pred_fallthru
        _
      %p205 = scmp.le.s32.totalorder 2, %s15
      // Predicated region
      $region37: #{tpu_custom_call.1} parent=5 // pred_check
        %p206 = pneg %p205
      $region38: #{tpu_custom_call.1} parent=5 // pred_check_branch
        %208 = sbr.rel (%p206) target = $region40
      $region39: #{tpu_custom_call.1} parent=5 // pred_region
        %s209 = ssub.s32 %s15, 2
        // Predicated region
        $region41: #{tpu_custom_call.1} parent=39 // pred_check
          %p210 = pneg %p91
        $region42: #{tpu_custom_call.1} parent=39 // pred_check_branch
          %212 = sbr.rel (%p210) target = $region44
        $region43: #{tpu_custom_call.1} parent=39 // pred_region
          %s213 = sand.u32 %s76, 1
          %s214 = scalar_lea.sflag [#allocation5], %s213
          %s215 = sand.u32 %s76, 1
          %s216 = smul.addr %s215, 16
          %s217 = scalar_lea.vmem [#allocation6], %s216
          %218 = dma.done %s214, 256
        $region44: #{tpu_custom_call.1} parent=39 // pred_fallthru
          _
      $region40: #{tpu_custom_call.1} parent=5 // pred_fallthru
        _
    $region6: #{tpu_custom_call.1} parent=1 // loop_footer
      %s19 = sadd.s32 1, %s15
    $region7: #{tpu_custom_call.1} parent=1 // loop_footer_branch
      %14 = sbr.rel target = $region3
    $region8: #{tpu_custom_call.1} parent=1 // loop_exit
      _
    %219 = vsyncpa [#allocation4], 1
    %s220 = scalar_lea.sflag [#allocation4], 1
    %221 = vsyncpa %s220, 1
    %222 = vsyncpa [#allocation5], 1
    %s223 = scalar_lea.sflag [#allocation5], 1
    %224 = vsyncpa %s223, 1

</llo_original>
